<compile_context>
chip_gen: v7x
topology: tpu7x:2x2x1
jax: 0.10.0
libtpu: 0.0.40
codegen_flags: <defaults>
</compile_context>

<pallas_src>
import functools
import math

import jax
import jax.numpy as jnp
from jax.experimental import pallas as pl
from jax.experimental.pallas import tpu as pltpu


def _conv2d_relu_kernel(x_ref, w_ref, b_ref, o_ref, *, kh, kw, row_stride, n_out):
    """Fused stride-1 conv + bias + ReLU for a chunk of batch elements.

    x_ref: (Bc, Cin, Lpad)    bf16 flattened zero-padded images (flat row stride = row_stride)
    w_ref: (Cout, kh*kw*Cin)  bf16 weight slab; column order is (tap_i, tap_j, cin)
    b_ref: (Cout, 1)          f32 bias
    o_ref: (Bc, Cout, n_out)  f32; n_out = (Hp-kh+1) * Wp (wrap columns sliced off by wrapper)
    """
    bc = o_ref.shape[0]
    w_slab = w_ref[...]                                 # (Cout, kh*kw*Cin) bf16
    bias = b_ref[...]                                   # (Cout, 1) f32
    for bi in range(bc):                                # static, small batch chunk
        x = x_ref[bi]                                   # (Cin, Lpad) bf16
        # Stack the kh*kw shifted windows into one (kh*kw*Cin, n_out) patch matrix so the MXU
        # sees a single contraction of depth kh*kw*Cin instead of kh*kw dots of depth Cin.
        taps = []
        for i in range(kh):
            for j in range(kw):
                off = i * row_stride + j
                taps.append(x[:, off:off + n_out])      # (Cin, n_out) static window slice
        patches = jnp.concatenate(taps, axis=0)         # (kh*kw*Cin, n_out) bf16
        acc = jnp.dot(w_slab, patches,
                      preferred_element_type=jnp.float32)   # (Cout, n_out) f32 accumulator
        acc = acc + bias
        o_ref[bi] = jnp.maximum(acc, 0.0).astype(o_ref.dtype)


def conv2d_relu(x, w, b, *, stride, padding):
    """PyTorch-semantics Conv2d (NCHW input, OIHW weight) followed by ReLU, as one Pallas kernel."""
    B, Cin, H, W = x.shape
    Cout, _, kh, kw = w.shape
    Hp, Wp = H + 2 * padding, W + 2 * padding
    h1, w1 = Hp - kh + 1, Wp - kw + 1                   # stride-1 output extent
    n_out = h1 * Wp                                     # lane-dense kernel output width
    Lpad = (Hp + 1) * Wp                                # one extra zero row covers the last tap

    # Single pad pass (spatial zero pad + one extra zero row for the flat tail), then a
    # metadata-only reshape.  bf16 operands for the MXU fast path; accumulation stays f32.
    xp = jnp.pad(x, ((0, 0), (0, 0), (padding, padding + 1), (padding, padding)))
    x_flat = xp.reshape(B, Cin, Lpad).astype(jnp.bfloat16)

    # One dense weight slab; column ordering (i, j, cin) matches the in-kernel patch stacking.
    w_slab = jnp.transpose(w, (0, 2, 3, 1)).reshape(Cout, kh * kw * Cin).astype(jnp.bfloat16)
    b_col = b.reshape(Cout, 1).astype(jnp.float32)

    # min(2, B) grid steps: 2 parallel steps keep both v7x TensorCores busy; on single-TC
    # v5e/v6e this is at most one extra ~0.35us step while still collapsing larger batches.
    g = 2 if (B >= 2 and B % 2 == 0) else 1
    bc = B // g

    out_flat = pl.pallas_call(
        functools.partial(_conv2d_relu_kernel, kh=kh, kw=kw, row_stride=Wp, n_out=n_out),
        out_shape=jax.ShapeDtypeStruct((B, Cout, n_out), jnp.float32),
        grid=(g,),
        in_specs=[
            pl.BlockSpec((bc, Cin, Lpad), lambda gg: (gg, 0, 0)),
            pl.BlockSpec((Cout, kh * kw * Cin), lambda gg: (0, 0)),
            pl.BlockSpec((Cout, 1), lambda gg: (0, 0)),
        ],
        out_specs=pl.BlockSpec((bc, Cout, n_out), lambda gg: (gg, 0, 0)),
        compiler_params=pltpu.CompilerParams(dimension_semantics=("parallel",)),
    )(x_flat, w_slab, b_col)

    # Back to NCHW: drop the wrap-around columns, apply the stride on the dense result.
    out = out_flat.reshape(B, Cout, h1, Wp)[:, :, ::stride, 0:w1:stride]
    return out


def init_params(key, cin, cout, k):
    """PyTorch Conv2d default init: U(-1/sqrt(fan_in), +1/sqrt(fan_in))."""
    kw_key, kb_key = jax.random.split(key)
    bound = 1.0 / math.sqrt(cin * k * k)
    w = jax.random.uniform(kw_key, (cout, cin, k, k), jnp.float32, -bound, bound)
    b = jax.random.uniform(kb_key, (cout,), jnp.float32, -bound, bound)
    return w, b


if __name__ == "__main__":
    B, Cin, H, W = 2, 4, 16, 16
    Cout, K, S, P = 8, 3, 1, 1

    key = jax.random.PRNGKey(0)
    pkey, xkey = jax.random.split(key)
    w, b = init_params(pkey, Cin, Cout, K)
    x = jax.random.normal(xkey, (B, Cin, H, W), jnp.float32)   # NCHW, like PyTorch

    fwd = jax.jit(functools.partial(conv2d_relu, stride=S, padding=P))
    out = fwd(x, w, b)
    jax.block_until_ready(out)

    Hout = (H + 2 * P - K) // S + 1
    Wout = (W + 2 * P - K) // S + 1
    assert out.shape == (B, Cout, Hout, Wout), out.shape

    # Primary check: same bf16-rounded inputs, f32 accumulation -> should match tightly.
    ref_bf16 = jax.lax.conv_general_dilated(
        x.astype(jnp.bfloat16), w.astype(jnp.bfloat16),
        window_strides=(S, S), padding=((P, P), (P, P)),
        dimension_numbers=("NCHW", "OIHW", "NCHW"),
        preferred_element_type=jnp.float32)
    ref_bf16 = jnp.maximum(ref_bf16 + b.reshape(1, Cout, 1, 1), 0.0)
    assert jnp.allclose(out, ref_bf16, atol=1e-3, rtol=1e-3), \
        float(jnp.max(jnp.abs(out - ref_bf16)))

    # Secondary check: full-f32 reference with bf16-appropriate tolerance (semantics guard).
    ref_f32 = jax.lax.conv_general_dilated(
        x, w, window_strides=(S, S), padding=((P, P), (P, P)),
        dimension_numbers=("NCHW", "OIHW", "NCHW"))
    ref_f32 = jnp.maximum(ref_f32 + b.reshape(1, Cout, 1, 1), 0.0)
    assert jnp.allclose(out, ref_f32, atol=5e-2, rtol=5e-2), \
        float(jnp.max(jnp.abs(out - ref_f32)))

    print("KERNEL_OK")
</pallas_src>

<mosaic_0001>
module attributes {stable_mosaic.version = 11 : i64} {
  func.func @_conv2d_relu_kernel(%arg0: i32, %arg1: memref<1x4x342xbf16, #tpu.memory_space<vmem>>, %arg2: memref<8x36xbf16, #tpu.memory_space<vmem>>, %arg3: memref<8x1xf32, #tpu.memory_space<vmem>>, %arg4: memref<1x8x288xf32, #tpu.memory_space<vmem>>) attributes {dimension_semantics = [#tpu.dimension_semantics<parallel>], iteration_bounds = array<i64: 2>, scalar_prefetch = 0 : i64, scratch_operands = 0 : i64, tpu.core_type = #tpu.core_type<tc>, window_params = [{transform_indices = @transform_0, window_bounds = array<i64: 1, 4, 342>}, {pipeline_mode = #tpu.pipeline_mode<synchronous>, transform_indices = @transform_1, window_bounds = array<i64: 8, 36>}, {pipeline_mode = #tpu.pipeline_mode<synchronous>, transform_indices = @transform_2, window_bounds = array<i64: 8, 1>}, {transform_indices = @transform_3, window_bounds = array<i64: 1, 8, 288>}]} {
    %c0 = arith.constant 0 : index
    %c0_0 = arith.constant 0 : index
    %0 = vector.load %arg2[%c0, %c0_0] : memref<8x36xbf16, #tpu.memory_space<vmem>>, vector<8x36xbf16>
    %c0_1 = arith.constant 0 : index
    %c0_2 = arith.constant 0 : index
    %1 = vector.load %arg3[%c0_1, %c0_2] : memref<8x1xf32, #tpu.memory_space<vmem>>, vector<8x1xf32>
    %c0_3 = arith.constant 0 : index
    %c0_4 = arith.constant 0 : index
    %c0_5 = arith.constant 0 : index
    %2 = vector.load %arg1[%c0_3, %c0_4, %c0_5] : memref<1x4x342xbf16, #tpu.memory_space<vmem>>, vector<1x4x342xbf16>
    %3 = vector.shape_cast %2 : vector<1x4x342xbf16> to vector<4x342xbf16>
    %4 = vector.extract_strided_slice %3 {offsets = [0, 0], sizes = [4, 288], strides = [1, 1]} : vector<4x342xbf16> to vector<4x288xbf16>
    %5 = vector.extract_strided_slice %3 {offsets = [0, 1], sizes = [4, 288], strides = [1, 1]} : vector<4x342xbf16> to vector<4x288xbf16>
    %6 = vector.extract_strided_slice %3 {offsets = [0, 2], sizes = [4, 288], strides = [1, 1]} : vector<4x342xbf16> to vector<4x288xbf16>
    %7 = vector.extract_strided_slice %3 {offsets = [0, 18], sizes = [4, 288], strides = [1, 1]} : vector<4x342xbf16> to vector<4x288xbf16>
    %8 = vector.extract_strided_slice %3 {offsets = [0, 19], sizes = [4, 288], strides = [1, 1]} : vector<4x342xbf16> to vector<4x288xbf16>
    %9 = vector.extract_strided_slice %3 {offsets = [0, 20], sizes = [4, 288], strides = [1, 1]} : vector<4x342xbf16> to vector<4x288xbf16>
    %10 = vector.extract_strided_slice %3 {offsets = [0, 36], sizes = [4, 288], strides = [1, 1]} : vector<4x342xbf16> to vector<4x288xbf16>
    %11 = vector.extract_strided_slice %3 {offsets = [0, 37], sizes = [4, 288], strides = [1, 1]} : vector<4x342xbf16> to vector<4x288xbf16>
    %12 = vector.extract_strided_slice %3 {offsets = [0, 38], sizes = [4, 288], strides = [1, 1]} : vector<4x342xbf16> to vector<4x288xbf16>
    %13 = tpu.concatenate %4, %5, %6, %7, %8, %9, %10, %11, %12 in 0 : vector<4x288xbf16>, vector<4x288xbf16>, vector<4x288xbf16>, vector<4x288xbf16>, vector<4x288xbf16>, vector<4x288xbf16>, vector<4x288xbf16>, vector<4x288xbf16>, vector<4x288xbf16> -> vector<36x288xbf16>
    %cst = arith.constant dense<0.000000e+00> : vector<8x288xf32>
    %14 = tpu.matmul %0, %13, %cst {dimension_numbers = #tpu.dot_dimension_numbers<[1], [0], [0], [1], [0, 0, 1, 1], [], []>} : vector<8x36xbf16>, vector<36x288xbf16>, vector<8x288xf32> -> vector<8x288xf32>
    %15 = vector.broadcast %1 : vector<8x1xf32> to vector<8x288xf32>
    %16 = arith.addf %14, %15 : vector<8x288xf32>
    %cst_6 = arith.constant 0.000000e+00 : f32
    %17 = vector.broadcast %cst_6 : f32 to vector<8x288xf32>
    %18 = arith.maximumf %16, %17 : vector<8x288xf32>
    %c0_7 = arith.constant 0 : index
    %c0_8 = arith.constant 0 : index
    %c0_9 = arith.constant 0 : index
    %19 = vector.load %arg4[%c0_7, %c0_8, %c0_9] : memref<1x8x288xf32, #tpu.memory_space<vmem>>, vector<1x8x288xf32>
    %20 = vector.shape_cast %19 : vector<1x8x288xf32> to vector<8x288xf32>
    %21 = vector.shape_cast %18 : vector<8x288xf32> to vector<1x8x288xf32>
    tpu.vector_store %arg4[%c0_7, %c0_8, %c0_9], %21 {strides = array<i32>} : memref<1x8x288xf32, #tpu.memory_space<vmem>>, vector<1x8x288xf32>,
    return
  }
  func.func @transform_0(%arg0: i32) -> (i32, i32, i32) {
    %c0_i32 = arith.constant 0 : i32
    %c0_i32_0 = arith.constant 0 : i32
    %c0_i32_1 = arith.constant 0 : i32
    return %arg0, %c0_i32, %c0_i32_0 : i32, i32, i32
  }
  func.func @transform_1(%arg0: i32) -> (i32, i32) {
    %c0_i32 = arith.constant 0 : i32
    %c0_i32_0 = arith.constant 0 : i32
    %c0_i32_1 = arith.constant 0 : i32
    return %c0_i32, %c0_i32_0 : i32, i32
  }
  func.func @transform_2(%arg0: i32) -> (i32, i32) {
    %c0_i32 = arith.constant 0 : i32
    %c0_i32_0 = arith.constant 0 : i32
    %c0_i32_1 = arith.constant 0 : i32
    return %c0_i32, %c0_i32_0 : i32, i32
  }
  func.func @transform_3(%arg0: i32) -> (i32, i32, i32) {
    %c0_i32 = arith.constant 0 : i32
    %c0_i32_0 = arith.constant 0 : i32
    %c0_i32_1 = arith.constant 0 : i32
    return %arg0, %c0_i32, %c0_i32_0 : i32, i32, i32
  }
}

</mosaic_0001>

<llo_original>
// kernel: conv2d_relu.1
$region0: #{conv2d_relu.1}
  #allocation0 [shape = 'u32[]', space=smem, size = 0x4, offset = 0x4, fixed_abs, tag = 'smem constant byte address 0x4 - core index']
  #allocation1 [shape = 'u32[144,128]{1,0:T(1,128)}', space=vmem, size = 0x12000, scoped, tag = 'internal scratch']
  %s0 = inlined_call_operand.vmem [shape: bf16[2,4,342], index: 0, kind: input, shape index: {}]
  %s1 = inlined_call_operand.vmem [shape: bf16[8,36], index: 1, kind: input, shape index: {}]
  %s2 = inlined_call_operand.vmem [shape: f32[8,1], index: 2, kind: input, shape index: {}]
  %s3 = inlined_call_operand.vmem [shape: f32[2,8,288], index: 3, kind: output, shape index: {}]
  %s4 = sld [smem:[#allocation0]]
  $region45: #{conv2d_relu.1} parent=0
    _
  %s6 = ssub.s32 1, %s4
  %s7 = scalar_select 0, %s6, %s4
  loop: start=0, step=1, limit=4
  $region2: #{conv2d_relu.1} parent=0 // loop_pre_header
    _
  $region3: #{conv2d_relu.1} parent=0 // loop_header
    %s9 = sphi 0, %s13
    %p10 = scmp.ge.s32.totalorder %s9, 4
    %s19 = sphi 0, %s21
    %s22 = sphi 0, %s19
    %s23 = sphi 0, %s22
    %s39 = sphi 0, %s23
    %s43 = sphi 0, %s43
    %s45 = sphi 0, %s43
    %s46 = sphi 0, %s45
    %s60 = sphi 0, %s46
    %s64 = sphi 0, %s64
    %s66 = sphi 0, %s64
    %s67 = sphi 0, %s66
    %s81 = sphi 0, %s67
    %s87 = sphi 0, %s89
    %s90 = sphi 0, %s87
    %s91 = sphi 0, %s90
    %s107 = sphi 0, %s91
  $region4: #{conv2d_relu.1} parent=0 // loop_header_branch
    %12 = sbr.rel (%p10) target = $region8
  $region5: #{conv2d_relu.1} parent=0 // loop_body
    %s14 = ssub.s32 %s9, 1
    %s15 = ssub.s32 %s9, 2
    %s16 = sadd.s32 %s9, 1
    %s17 = ssub.s32 %s9, %s16
    %p18 = scmp.eq.s32.totalorder %s17, 0
    %s20 = sadd.s32 %s19, 1
    %s21 = scalar_select %p18, %s19, %s20
    %p24 = pneg %p18
    %p25 = scmp.eq.s32.totalorder %s9, 1
    %p26 = por %p24, %p25
    %p27 = scmp.ne.s32.totalorder %s19, %s22
    %p28 = scmp.eq.s32.totalorder %s9, 0
    %p29 = por %p27, %p28
    %p30 = scmp.ne.s32.totalorder %s19, %s22
    %p31 = scmp.eq.s32.totalorder %s14, 1
    %p32 = por %p30, %p31
    %p33 = scmp.ne.s32.totalorder %s22, %s23
    %p34 = scmp.eq.s32.totalorder %s14, 0
    %p35 = por %p33, %p34
    %p36 = scmp.ne.s32.totalorder %s22, %s23
    %p37 = scmp.eq.s32.totalorder %s15, 1
    %p38 = por %p36, %p37
    %p40 = scmp.ne.s32.totalorder %s23, %s39
    %p41 = scmp.eq.s32.totalorder %s15, 0
    %p42 = por %p40, %p41
    %s44 = sadd.s32 %s43, 1
    %p47 = scmp.eq.s32.totalorder %s9, 1
    %p48 = scmp.ne.s32.totalorder %s43, %s45
    %p49 = scmp.eq.s32.totalorder %s9, 0
    %p50 = por %p48, %p49
    %p51 = scmp.ne.s32.totalorder %s43, %s45
    %p52 = scmp.eq.s32.totalorder %s14, 1
    %p53 = por %p51, %p52
    %p54 = scmp.ne.s32.totalorder %s45, %s46
    %p55 = scmp.eq.s32.totalorder %s14, 0
    %p56 = por %p54, %p55
    %p57 = scmp.ne.s32.totalorder %s45, %s46
    %p58 = scmp.eq.s32.totalorder %s15, 1
    %p59 = por %p57, %p58
    %p61 = scmp.ne.s32.totalorder %s46, %s60
    %p62 = scmp.eq.s32.totalorder %s15, 0
    %p63 = por %p61, %p62
    %s65 = sadd.s32 %s64, 1
    %p68 = scmp.eq.s32.totalorder %s9, 1
    %p69 = scmp.ne.s32.totalorder %s64, %s66
    %p70 = scmp.eq.s32.totalorder %s9, 0
    %p71 = por %p69, %p70
    %p72 = scmp.ne.s32.totalorder %s64, %s66
    %p73 = scmp.eq.s32.totalorder %s14, 1
    %p74 = por %p72, %p73
    %p75 = scmp.ne.s32.totalorder %s66, %s67
    %p76 = scmp.eq.s32.totalorder %s14, 0
    %p77 = por %p75, %p76
    %p78 = scmp.ne.s32.totalorder %s66, %s67
    %p79 = scmp.eq.s32.totalorder %s15, 1
    %p80 = por %p78, %p79
    %p82 = scmp.ne.s32.totalorder %s67, %s81
    %p83 = scmp.eq.s32.totalorder %s15, 0
    %p84 = por %p82, %p83
    %s85 = ssub.s32 %s9, %s16
    %p86 = scmp.eq.s32.totalorder %s85, 0
    %s88 = sadd.s32 %s87, 1
    %s89 = scalar_select %p86, %s87, %s88
    %p92 = pneg %p86
    %p93 = scmp.eq.s32.totalorder %s9, 1
    %p94 = por %p92, %p93
    %p95 = scmp.ne.s32.totalorder %s87, %s90
    %p96 = scmp.eq.s32.totalorder %s9, 0
    %p97 = por %p95, %p96
    %p98 = scmp.ne.s32.totalorder %s87, %s90
    %p99 = scmp.eq.s32.totalorder %s14, 1
    %p100 = por %p98, %p99
    %p101 = scmp.ne.s32.totalorder %s90, %s91
    %p102 = scmp.eq.s32.totalorder %s14, 0
    %p103 = por %p101, %p102
    %p104 = scmp.ne.s32.totalorder %s90, %s91
    %p105 = scmp.eq.s32.totalorder %s15, 1
    %p106 = por %p104, %p105
    %p108 = scmp.ne.s32.totalorder %s91, %s107
    %p109 = scmp.eq.s32.totalorder %s15, 0
    %p110 = por %p108, %p109
    %p111 = scmp.le.s32.totalorder 1, %s9
    %p112 = scmp.lt.s32.totalorder %s9, 3
    %p113 = pnand %p111, %p112
    %p114 = pneg %p113
    // Predicated region
    $region9: #{conv2d_relu.1} parent=5 // pred_check
      _
    $region10: #{conv2d_relu.1} parent=5 // pred_check_branch
      %116 = sbr.rel (%p113) target = $region12
    $region11: #{conv2d_relu.1} parent=5 // pred_region
      %s117 = ssub.s32 %s9, 1
      // Predicated region
      $region13: #{conv2d_relu.1} parent=11 // pred_check
        %p118 = pneg %p56
      $region14: #{conv2d_relu.1} parent=11 // pred_check_branch
        %120 = sbr.rel (%p118) target = $region16
      $region15: #{conv2d_relu.1} parent=11 // pred_region
        _
      $region16: #{conv2d_relu.1} parent=11 // pred_fallthru
        _
      // Predicated region
      $region17: #{conv2d_relu.1} parent=11 // pred_check
        %p121 = pneg %p77
      $region18: #{conv2d_relu.1} parent=11 // pred_check_branch
        %123 = sbr.rel (%p121) target = $region20
      $region19: #{conv2d_relu.1} parent=11 // pred_region
        _
      $region20: #{conv2d_relu.1} parent=11 // pred_fallthru
        _
    $region12: #{conv2d_relu.1} parent=5 // pred_fallthru
      _
    %p124 = scmp.lt.s32.totalorder %s9, 2
    // Predicated region
    $region21: #{conv2d_relu.1} parent=5 // pred_check
      %p125 = pneg %p124
    $region22: #{conv2d_relu.1} parent=5 // pred_check_branch
      %127 = sbr.rel (%p125) target = $region24
    $region23: #{conv2d_relu.1} parent=5 // pred_region
      // Predicated region
      $region25: #{conv2d_relu.1} parent=23 // pred_check
        %p128 = pneg %p29
      $region26: #{conv2d_relu.1} parent=23 // pred_check_branch
        %130 = sbr.rel (%p128) target = $region28
      $region27: #{conv2d_relu.1} parent=23 // pred_region
        %p131 = scmp.lt.s32.totalorder %s9, 1
        %s132 = scalar_select %p131, %s9, 1
        %s133 = smul.addr %s132, 3
        %s134 = smul.addr %s133, 2
        %s135 = scalar_lea.vmem %s0, %s134
      $region28: #{conv2d_relu.1} parent=23 // pred_fallthru
        _
    $region24: #{conv2d_relu.1} parent=5 // pred_fallthru
      _
    %p136 = scmp.le.s32.totalorder 1, %s9
    %p137 = scmp.lt.s32.totalorder %s9, 3
    %p138 = pnand %p136, %p137
    %p139 = pneg %p138
    // Predicated region
    $region29: #{conv2d_relu.1} parent=5 // pred_check
      _
    $region30: #{conv2d_relu.1} parent=5 // pred_check_branch
      %141 = sbr.rel (%p138) target = $region32
    $region31: #{conv2d_relu.1} parent=5 // pred_region
      %s142 = ssub.s32 %s9, 1
      %p143 = scmp.lt.s32.totalorder %s14, 1
      %s144 = scalar_select %p143, %s14, 1
      %s145 = smul.addr %s144, 3
      %s146 = smul.addr %s145, 2
      %s147 = scalar_lea.vmem %s0, %s146
      %p148 = pneg %p35
      %p149 = pneg %p32
      %p150 = pneg %p56
      %p151 = pneg %p53
      %p152 = pneg %p77
      %p153 = pneg %p74
      %p154 = pneg %p103
      %p155 = pneg %p100
      %p156 = scmp.lt.s32.totalorder %s14, 1
      %s157 = scalar_select %p156, %s14, 1
      %s158 = smul.addr %s157, 3
      %s159 = smul.addr %s158, 8
      %s160 = scalar_lea.vmem %s3, %s159
      %p161 = scmp.lt.s32.totalorder %s14, 1
      %s162 = scalar_select %p161, %s14, 1
      %s163 = smul.addr %s162, 3
      %s164 = smul.addr %s163, 2
      %s165 = scalar_lea.vmem %s0, %s164
      %p166 = scmp.lt.s32.totalorder %s14, 1
      %s167 = scalar_select %p166, %s14, 1
      %s168 = smul.addr %s167, 3
      %s169 = smul.addr %s168, 8
      %s170 = scalar_lea.vmem %s3, %s169
      %v172 = vld [vmem:[%s1] sm:$0xf]
      %v173 = vld [vmem:[%s2] sm:$0xff]
      %v174 = vld [vmem:[%s165] sm:$0x3f]
      %v176 = vcombine.high %v174, %v174
      %v178 = vunpack.c.l.s4 1983009808
      %v179 = vunpack.c.0.s8 %v178
      %v180 = vlaneseq
      %v181 = vshrl.u32 %v180, 7
      %v182 = vsub.s32 %v179, %v181
      %v183 = vrot.slane %v174, %v182
      %v185 = vunpack.c.l.s4 1983009808
      %v186 = vunpack.c.0.s8 %v185
      %v187 = vlaneseq
      %v188 = vshrl.u32 %v187, 7
      %v189 = vsub.s32 %v186, %v188
      %v190 = vrot.slane %v176, %v189
      %v191 = vcombine.high %v183, %v183
      %v192 = vcombine.low %v174, %v174
      %v194 = vunpack.c.l.s4 1983009808
      %v195 = vunpack.c.0.s8 %v194
      %v196 = vlaneseq
      %v197 = vshrl.u32 %v196, 7
      %v198 = vsub.s32 %v195, %v197
      %v199 = vrot.slane %v192, %v198
      %v200 = vcombine.high %v199, %v199
      %201 = vrot.lane.b32.xlu0 %v199, 127
      %v202 = vpop.permute.xlu0 %201
      %203 = vrot.lane.b32.xlu0 %v200, 127
      %v204 = vpop.permute.xlu0 %203
      %205 = vrot.lane.b32.xlu0 %v183, 127
      %v206 = vpop.permute.xlu0 %205
      %vm207 = vcmask 1039360
      %v208 = vsel %vm207, %v202, %v204
      %v209 = vsel %vm207, %v204, %v206
      %v210 = vcombine.low %v183, %v183
      %v211 = vcombine.low %v190, %v190
      %212 = vrot.lane.b32.xlu0 %v210, 126
      %v213 = vpop.permute.xlu0 %212
      %214 = vrot.lane.b32.xlu0 %v183, 126
      %v215 = vpop.permute.xlu0 %214
      %216 = vrot.lane.b32.xlu0 %v211, 126
      %v217 = vpop.permute.xlu0 %216
      %vm218 = vcmask 1031168
      %v219 = vsel %vm218, %v213, %v215
      %v220 = vsel %vm218, %v215, %v217
      %v221 = vcombine.low %v199, %v199
      %222 = vrot.lane.b32.xlu0 %v221, 110
      %v223 = vpop.permute.xlu0 %222
      %224 = vrot.lane.b32.xlu0 %v199, 110
      %v225 = vpop.permute.xlu0 %224
      %226 = vrot.lane.b32.xlu0 %v210, 110
      %v227 = vpop.permute.xlu0 %226
      %vm228 = vcmask 900096
      %v229 = vsel %vm228, %v223, %v225
      %v230 = vsel %vm228, %v225, %v227
      %231 = vrot.lane.b32.xlu0 %v183, 109
      %v232 = vpop.permute.xlu0 %231
      %233 = vrot.lane.b32.xlu0 %v191, 109
      %v234 = vpop.permute.xlu0 %233
      %235 = vrot.lane.b32.xlu0 %v190, 109
      %v236 = vpop.permute.xlu0 %235
      %vm237 = vcmask 891904
      %v238 = vsel %vm237, %v232, %v234
      %v239 = vsel %vm237, %v234, %v236
      %240 = vrot.lane.b32.xlu0 %v199, 108
      %v241 = vpop.permute.xlu0 %240
      %242 = vrot.lane.b32.xlu0 %v200, 108
      %v243 = vpop.permute.xlu0 %242
      %244 = vrot.lane.b32.xlu0 %v183, 108
      %v245 = vpop.permute.xlu0 %244
      %vm246 = vcmask 883712
      %v247 = vsel %vm246, %v241, %v243
      %v248 = vsel %vm246, %v243, %v245
      %249 = vrot.lane.b32.xlu0 %v210, 92
      %v250 = vpop.permute.xlu0 %249
      %251 = vrot.lane.b32.xlu0 %v183, 92
      %v252 = vpop.permute.xlu0 %251
      %253 = vrot.lane.b32.xlu0 %v211, 92
      %v254 = vpop.permute.xlu0 %253
      %vm255 = vcmask 752640
      %v256 = vsel %vm255, %v250, %v252
      %v257 = vsel %vm255, %v252, %v254
      %258 = vrot.lane.b32.xlu0 %v221, 91
      %v259 = vpop.permute.xlu0 %258
      %260 = vrot.lane.b32.xlu0 %v199, 91
      %v261 = vpop.permute.xlu0 %260
      %262 = vrot.lane.b32.xlu0 %v210, 91
      %v263 = vpop.permute.xlu0 %262
      %vm264 = vcmask 744448
      %v265 = vsel %vm264, %v259, %v261
      %v266 = vsel %vm264, %v261, %v263
      %267 = vrot.lane.b32.xlu0 %v183, 90
      %v268 = vpop.permute.xlu0 %267
      %269 = vrot.lane.b32.xlu0 %v191, 90
      %v270 = vpop.permute.xlu0 %269
      %271 = vrot.lane.b32.xlu0 %v190, 90
      %v272 = vpop.permute.xlu0 %271
      %vm273 = vcmask 736256
      %v274 = vsel %vm273, %v268, %v270
      %v275 = vsel %vm273, %v270, %v272
      %vm276 = vcmask 1041408
      %v279 = vsel %vm276, %v183, %v208
      %v282 = vsel %vm276, %v191, %v209
      %v285 = vsel %vm276, %v190, %v206
      %vm286 = vcmask 1043456
      %v288 = vsel %vm286, %v279, %v219
      %v290 = vsel %vm286, %v282, %v220
      %v292 = vsel %vm286, %v285, %v217
      %vm293 = vcmask 1045504
      %v295 = vsel %vm293, %v288, %v229
      %v298 = vsel %vm293, %v290, %v230
      %v301 = vsel %vm293, %v292, %v227
      %v305 = vsel %vm276, %v238, %v247
      %v308 = vsel %vm276, %v239, %v248
      %v311 = vsel %vm276, %v236, %v245
      %v313 = vsel %vm286, %v305, %v256
      %v315 = vsel %vm286, %v308, %v257
      %v317 = vsel %vm286, %v311, %v254
      %v319 = vsel %vm293, %v313, %v265
      %v322 = vsel %vm293, %v315, %v266
      %v325 = vsel %vm293, %v317, %v263
      %328 = vset.pattern.permute.xlu0 0
      %329 = vperm.xlu0 %328, %v173
      %v330 = vpop.permute.xlu0 %329
      %vm332 = vcmask 293888
      %v334 = vsel %vm332, %v172, 0
      %v337 = vsel %vm276, %v274, 0
      %v340 = vsel %vm276, %v275, 0
      %v343 = vsel %vm276, %v272, 0
      %345 = vmatprep.subr.bf16.mxu0 %v298
      %346 = vmatpush1.bf16.msra.mxu0 %v295
      %347 = vmatprep.subr.bf16.mxu0 %v322
      %348 = vmatpush1.bf16.msra.mxu0 %v319
      %349 = vmatprep.subr.bf16.mxu0 %v340
      %350 = vmatpush1.bf16.msra.mxu0 %v337
      %351 = vmatprep.subr.bf16.mxu0 0
      %352 = vmatpush1.bf16.msra.mxu0 0
      %353 = vmatprep.subr.bf16.mxu0 0
      %354 = vmatpush1.bf16.msra.mxu0 0
      %355 = vmatprep.subr.bf16.mxu0 0
      %356 = vmatpush1.bf16.msra.mxu0 0
      %357 = vmatprep.subr.bf16.mxu0 0
      %358 = vmatpush1.bf16.msra.mxu0 0
      %359 = vmatprep.subr.bf16.mxu0 0
      %360 = vmatpush1.bf16.msra.mxu0 0
      %361 = vmatprep.subr.bf16.mxu0 0
      %362 = vmatpush1.bf16.msra.mxu0 0
      %363 = vmatprep.subr.bf16.mxu0 0
      %364 = vmatpush1.bf16.msra.mxu0 0
      %365 = vmatprep.subr.bf16.mxu0 0
      %366 = vmatpush1.bf16.msra.mxu0 0
      %367 = vmatprep.subr.bf16.mxu0 0
      %368 = vmatpush1.bf16.msra.mxu0 0
      %369 = vmatprep.subr.bf16.mxu0 0
      %370 = vmatpush1.bf16.msra.mxu0 0
      %371 = vmatprep.subr.bf16.mxu0 0
      %372 = vmatpush1.bf16.msra.mxu0 0
      %373 = vmatprep.subr.bf16.mxu0 0
      %374 = vmatpush1.bf16.msra.mxu0 0
      %375 = vmatprep.subr.bf16.mxu0 0
      %376 = vmatpush1.bf16.msra.mxu0 0
      %377 = vmatprep.mubr.bf16.mxu0 0
      %378 = vmatmul.mubr.bf16.gmra.mrb[0].mxu0 %v334
      %v379 = vpop.f32.mrb[0].mxu0
      %v380 = vadd.f32 %v330, %v379
      %v381 = vpop.f32.mrb[0].mxu0
      %v382 = vadd.f32 %v330, %v381
      %v383 = vpop.f32.mrb[0].mxu0
      %v384 = vpop.f32.mrb[0].mxu0
      %385 = vdwg.mxu0
      %386 = vmatprep.subr.bf16.mxu0 0
      %387 = vmatpush1.bf16.msra.mxu0 %v301
      %388 = vmatprep.subr.bf16.mxu0 0
      %389 = vmatpush1.bf16.msra.mxu0 %v325
      %390 = vmatprep.subr.bf16.mxu0 0
      %391 = vmatpush1.bf16.msra.mxu0 %v343
      %392 = vmatprep.subr.bf16.mxu0 0
      %393 = vmatpush1.bf16.msra.mxu0 0
      %394 = vmatprep.subr.bf16.mxu0 0
      %395 = vmatpush1.bf16.msra.mxu0 0
      %396 = vmatprep.subr.bf16.mxu0 0
      %397 = vmatpush1.bf16.msra.mxu0 0
      %398 = vmatprep.subr.bf16.mxu0 0
      %399 = vmatpush1.bf16.msra.mxu0 0
      %400 = vmatprep.subr.bf16.mxu0 0
      %401 = vmatpush1.bf16.msra.mxu0 0
      %402 = vmatprep.subr.bf16.mxu0 0
      %403 = vmatpush1.bf16.msra.mxu0 0
      %404 = vmatprep.subr.bf16.mxu0 0
      %405 = vmatpush1.bf16.msra.mxu0 0
      %406 = vmatprep.subr.bf16.mxu0 0
      %407 = vmatpush1.bf16.msra.mxu0 0
      %408 = vmatprep.subr.bf16.mxu0 0
      %409 = vmatpush1.bf16.msra.mxu0 0
      %410 = vmatprep.subr.bf16.mxu0 0
      %411 = vmatpush1.bf16.msra.mxu0 0
      %412 = vmatprep.subr.bf16.mxu0 0
      %413 = vmatpush1.bf16.msra.mxu0 0
      %414 = vmatprep.subr.bf16.mxu0 0
      %415 = vmatpush1.bf16.msra.mxu0 0
      %416 = vmatprep.subr.bf16.mxu0 0
      %417 = vmatpush1.bf16.msra.mxu0 0
      %418 = vmatprep.mubr.bf16.mxu0 0
      %419 = vmatmul.mubr.bf16.gmra.mrb[0].mxu0 %v334
      %v420 = vpop.f32.mrb[0].mxu0
      %v421 = vadd.f32 %v330, %v420
      %v422 = vpop.f32.mrb[0].mxu0
      %v423 = vpop.f32.mrb[0].mxu0
      %v424 = vpop.f32.mrb[0].mxu0
      %425 = vdwg.mxu0
      %v426 = vmax.f32 %v380, 0.0
      %v427 = vmax.f32 %v382, 0.0
      %v428 = vmax.f32 %v421, 0.0
      %429 = vst [vmem:[%s170] sm:$0xff] %v426
      %430 = vst [vmem:[%s170 + $0x8] sm:$0xff] %v427
      %vm431 = vcmask 261120
      %432 = vst.msk [vmem:[%s170 + $0x10] sm:$0xff] %vm431, %v428
      %p433 = scmp.lt.s32.totalorder %s14, 1
      %s434 = scalar_select %p433, %s14, 1
      %s435 = smul.addr %s434, 3
      %s436 = smul.addr %s435, 8
      %s437 = scalar_lea.vmem %s3, %s436
      // Predicated region
      $region33: #{conv2d_relu.1} parent=31 // pred_check
        %p438 = pneg %p100
      $region34: #{conv2d_relu.1} parent=31 // pred_check_branch
        %440 = sbr.rel (%p438) target = $region36
      $region35: #{conv2d_relu.1} parent=31 // pred_region
        _
      $region36: #{conv2d_relu.1} parent=31 // pred_fallthru
        _
    $region32: #{conv2d_relu.1} parent=5 // pred_fallthru
      _
    %p441 = scmp.le.s32.totalorder 2, %s9
    // Predicated region
    $region37: #{conv2d_relu.1} parent=5 // pred_check
      %p442 = pneg %p441
    $region38: #{conv2d_relu.1} parent=5 // pred_check_branch
      %444 = sbr.rel (%p442) target = $region40
    $region39: #{conv2d_relu.1} parent=5 // pred_region
      %s445 = ssub.s32 %s9, 2
      // Predicated region
      $region41: #{conv2d_relu.1} parent=39 // pred_check
        %p446 = pneg %p106
      $region42: #{conv2d_relu.1} parent=39 // pred_check_branch
        %448 = sbr.rel (%p446) target = $region44
      $region43: #{conv2d_relu.1} parent=39 // pred_region
        %p449 = scmp.lt.s32.totalorder %s15, 1
        %s450 = scalar_select %p449, %s15, 1
        %s451 = smul.addr %s450, 3
        %s452 = smul.addr %s451, 8
        %s453 = scalar_lea.vmem %s3, %s452
      $region44: #{conv2d_relu.1} parent=39 // pred_fallthru
        _
    $region40: #{conv2d_relu.1} parent=5 // pred_fallthru
      _
  $region6: #{conv2d_relu.1} parent=0 // loop_footer
    %s13 = sadd.s32 1, %s9
  $region7: #{conv2d_relu.1} parent=0 // loop_footer_branch
    %8 = sbr.rel target = $region3
  $region8: #{conv2d_relu.1} parent=0 // loop_exit
    _

</llo_original>
